<compile_context>
chip_gen: v5e
topology: v5e:2x2
jax: 0.10.0
libtpu: 0.0.40
codegen_flags: <defaults>
</compile_context>

<pallas_src>
import jax
import jax.numpy as jnp
from jax.experimental import pallas as pl
from jax.experimental.pallas import tpu as pltpu

INPUT_DIM = 32   # input_dim of Net (small example shape)
HIDDEN = 200     # fc1 out features (padded to 256 for the kernel)
OUT = 1          # fc2 out features
LANE = 128


def _round_up(n, m):
    return ((n + m - 1) // m) * m


def net_kernel(xt_ref, w1t_ref, b1_ref, w2_ref, b2_ref, o_ref):
    # Layer 1 on the MXU: (Hp, D) @ (D, TB) -> (Hp, TB).  Batch lives on the lane axis.
    h = jnp.dot(w1t_ref[...], xt_ref[...], preferred_element_type=jnp.float32)
    # Bias (Hp, 1) broadcasts across lanes; ReLU on the VPU.
    h = jnp.maximum(h + b1_ref[...], 0.0)
    # Layer 2 (hidden -> 1): VPU multiply + cross-sublane (XLU) reduction instead of an
    # N=1 MXU matmul.  Zero-padded rows of w2 kill the padded hidden sublanes.
    z = jnp.sum(h * w2_ref[...], axis=0, keepdims=True) + b2_ref[0]   # (1, TB)
    # Sigmoid: exp and approximate reciprocal both run on the EUP slot.
    y = pl.reciprocal(1.0 + jnp.exp(-z), approx=True)
    o_ref[...] = y.astype(o_ref.dtype)


def net_forward(x, w1t, b1, w2, b2, *, block_b=1024):
    """x: (B, input_dim) f32; (w1t, b1, w2, b2) from prepare_params()."""
    B, D = x.shape
    Hp = w1t.shape[0]

    # Tile the batch; pad it so every block is lane-dense (multiple of 128) and the
    # grid covers the array exactly (no partial / masked tiles anywhere).
    tb = min(block_b, _round_up(B, LANE))
    b_pad = _round_up(B, tb)
    grid_n = b_pad // tb

    # Layout plumbing (done once by XLA outside the kernel): batch on the lane axis,
    # zero-padded tail columns (harmless: they just compute sigmoid of the biases).
    xt = jnp.zeros((D, b_pad), jnp.float32).at[:, :B].set(x.T)

    out = pl.pallas_call(
        net_kernel,
        out_shape=jax.ShapeDtypeStruct((1, b_pad), jnp.float32),
        grid=(grid_n,),
        in_specs=[
            pl.BlockSpec((D, tb), lambda i: (0, i)),             # streamed x^T tile
            pl.BlockSpec((Hp, D), lambda i: (0, 0)),             # resident W1^T (padded)
            pl.BlockSpec((Hp, 1), lambda i: (0, 0)),             # resident b1 column
            pl.BlockSpec((Hp, 1), lambda i: (0, 0)),             # resident w2 column
            pl.BlockSpec(memory_space=pltpu.MemorySpace.SMEM),   # scalar b2
        ],
        out_specs=pl.BlockSpec((1, tb), lambda i: (0, i)),       # lane-dense output slab
        compiler_params=pltpu.CompilerParams(
            dimension_semantics=("parallel",),   # shard batch tiles across TCs
        ),
    )(xt, w1t, b1, w2, b2)

    # Back to the module's (B, 1) convention; drops padded tail columns.
    return out[0, :B].reshape(B, OUT)


def init_params(key, input_dim=INPUT_DIM, hidden=HIDDEN, out=OUT):
    """PyTorch nn.Linear-style params: weight (out, in), bias (out,), U[-1/sqrt(fan_in), +]."""
    k1, k2, k3, k4 = jax.random.split(key, 4)
    bound1 = 1.0 / jnp.sqrt(jnp.float32(input_dim))
    bound2 = 1.0 / jnp.sqrt(jnp.float32(hidden))
    fc1_w = jax.random.uniform(k1, (hidden, input_dim), jnp.float32, -bound1, bound1)
    fc1_b = jax.random.uniform(k2, (hidden,), jnp.float32, -bound1, bound1)
    fc2_w = jax.random.uniform(k3, (out, hidden), jnp.float32, -bound2, bound2)
    fc2_b = jax.random.uniform(k4, (out,), jnp.float32, -bound2, bound2)
    return fc1_w, fc1_b, fc2_w, fc2_b


def prepare_params(fc1_w, fc1_b, fc2_w, fc2_b):
    """Zero-pad hidden 200 -> 256 and lay the params out for the kernel."""
    hidden, input_dim = fc1_w.shape
    hp = _round_up(hidden, LANE)                                               # 200 -> 256
    w1t = jnp.zeros((hp, input_dim), jnp.float32).at[:hidden, :].set(fc1_w)    # (Hp, D)
    b1c = jnp.zeros((hp, 1), jnp.float32).at[:hidden, 0].set(fc1_b)            # (Hp, 1)
    w2c = jnp.zeros((hp, 1), jnp.float32).at[:hidden, 0].set(fc2_w[0])         # (Hp, 1), OUT == 1
    b2s = fc2_b.astype(jnp.float32).reshape((1,))                              # SMEM scalar
    return w1t, b1c, w2c, b2s


def reference(x, fc1_w, fc1_b, fc2_w, fc2_b):
    h = jnp.maximum(x @ fc1_w.T + fc1_b, 0.0)
    return jax.nn.sigmoid(h @ fc2_w.T + fc2_b)


if __name__ == "__main__":
    key = jax.random.PRNGKey(0)
    kx, kp = jax.random.split(key)
    batch = 8
    x = jax.random.normal(kx, (batch, INPUT_DIM), jnp.float32)

    fc1_w, fc1_b, fc2_w, fc2_b = init_params(kp)
    w1t, b1c, w2c, b2s = prepare_params(fc1_w, fc1_b, fc2_w, fc2_b)

    out = net_forward(x, w1t, b1c, w2c, b2s)
    out = jax.block_until_ready(out)

    ref = reference(x, fc1_w, fc1_b, fc2_w, fc2_b)
    assert out.shape == (batch, OUT)
    # approx (EUP) reciprocal in the sigmoid trades a few 1e-4 of absolute accuracy.
    assert jnp.allclose(out, ref, atol=2e-3, rtol=2e-3), float(jnp.max(jnp.abs(out - ref)))
    print("KERNEL_OK")
</pallas_src>

<mosaic_0001>
module attributes {stable_mosaic.version = 11 : i64} {
  func.func @net_kernel(%arg0: i32, %arg1: memref<32x128xf32, #tpu.memory_space<vmem>>, %arg2: memref<256x32xf32, #tpu.memory_space<vmem>>, %arg3: memref<256x1xf32, #tpu.memory_space<vmem>>, %arg4: memref<256x1xf32, #tpu.memory_space<vmem>>, %arg5: memref<1xf32, #tpu.memory_space<smem>>, %arg6: memref<1x128xf32, #tpu.memory_space<vmem>>) attributes {dimension_semantics = [#tpu.dimension_semantics<parallel>], iteration_bounds = array<i64: 1>, scalar_prefetch = 0 : i64, scratch_operands = 0 : i64, tpu.core_type = #tpu.core_type<tc>, window_params = [{transform_indices = @transform_0, window_bounds = array<i64: 32, 128>}, {pipeline_mode = #tpu.pipeline_mode<synchronous>, transform_indices = @transform_1, window_bounds = array<i64: 256, 32>}, {pipeline_mode = #tpu.pipeline_mode<synchronous>, transform_indices = @transform_2, window_bounds = array<i64: 256, 1>}, {pipeline_mode = #tpu.pipeline_mode<synchronous>, transform_indices = @transform_3, window_bounds = array<i64: 256, 1>}, {transform_indices = @transform_4, window_bounds = array<i64: 1>}, {transform_indices = @transform_5, window_bounds = array<i64: 1, 128>}]} {
    %c0 = arith.constant 0 : index
    %c0_0 = arith.constant 0 : index
    %0 = vector.load %arg2[%c0, %c0_0] : memref<256x32xf32, #tpu.memory_space<vmem>>, vector<256x32xf32>
    %c0_1 = arith.constant 0 : index
    %c0_2 = arith.constant 0 : index
    %1 = vector.load %arg1[%c0_1, %c0_2] : memref<32x128xf32, #tpu.memory_space<vmem>>, vector<32x128xf32>
    %cst = arith.constant dense<0.000000e+00> : vector<256x128xf32>
    %2 = tpu.matmul %0, %1, %cst {dimension_numbers = #tpu.dot_dimension_numbers<[1], [0], [0], [1], [0, 0, 1, 1], [], []>} : vector<256x32xf32>, vector<32x128xf32>, vector<256x128xf32> -> vector<256x128xf32>
    %c0_3 = arith.constant 0 : index
    %c0_4 = arith.constant 0 : index
    %3 = vector.load %arg3[%c0_3, %c0_4] : memref<256x1xf32, #tpu.memory_space<vmem>>, vector<256x1xf32>
    %4 = vector.broadcast %3 : vector<256x1xf32> to vector<256x128xf32>
    %5 = arith.addf %2, %4 : vector<256x128xf32>
    %cst_5 = arith.constant 0.000000e+00 : f32
    %6 = vector.broadcast %cst_5 : f32 to vector<256x128xf32>
    %7 = arith.maximumf %5, %6 : vector<256x128xf32>
    %c0_6 = arith.constant 0 : index
    %c0_7 = arith.constant 0 : index
    %8 = vector.load %arg4[%c0_6, %c0_7] : memref<256x1xf32, #tpu.memory_space<vmem>>, vector<256x1xf32>
    %9 = vector.broadcast %8 : vector<256x1xf32> to vector<256x128xf32>
    %10 = arith.mulf %7, %9 : vector<256x128xf32>
    %cst_8 = arith.constant dense<0.000000e+00> : vector<128xf32>
    %11 = vector.multi_reduction <add>, %10, %cst_8 [0] : vector<256x128xf32> to vector<128xf32>
    %12 = vector.shape_cast %11 : vector<128xf32> to vector<1x128xf32>
    %c0_9 = arith.constant 0 : index
    %13 = memref.load %arg5[%c0_9] : memref<1xf32, #tpu.memory_space<smem>>
    %14 = vector.broadcast %13 : f32 to vector<1x128xf32>
    %15 = arith.addf %12, %14 : vector<1x128xf32>
    %cst_10 = arith.constant 0.000000e+00 : f32
    %16 = vector.broadcast %cst_10 : f32 to vector<1x128xf32>
    %17 = arith.subf %16, %15 : vector<1x128xf32>
    %18 = math.exp %17 : vector<1x128xf32>
    %cst_11 = arith.constant 1.000000e+00 : f32
    %19 = vector.broadcast %cst_11 : f32 to vector<1x128xf32>
    %20 = arith.addf %19, %18 : vector<1x128xf32>
    %21 = tpu.reciprocal %20 {approx = true} : vector<1x128xf32> -> vector<1x128xf32>
    %c0_12 = arith.constant 0 : index
    %c0_13 = arith.constant 0 : index
    %22 = vector.load %arg6[%c0_12, %c0_13] : memref<1x128xf32, #tpu.memory_space<vmem>>, vector<1x128xf32>
    tpu.vector_store %arg6[%c0_12, %c0_13], %21 {strides = array<i32>} : memref<1x128xf32, #tpu.memory_space<vmem>>, vector<1x128xf32>,
    return
  }
  func.func @transform_0(%arg0: i32) -> (i32, i32) {
    %c0_i32 = arith.constant 0 : i32
    %c0_i32_0 = arith.constant 0 : i32
    return %c0_i32, %arg0 : i32, i32
  }
  func.func @transform_1(%arg0: i32) -> (i32, i32) {
    %c0_i32 = arith.constant 0 : i32
    %c0_i32_0 = arith.constant 0 : i32
    %c0_i32_1 = arith.constant 0 : i32
    return %c0_i32, %c0_i32_0 : i32, i32
  }
  func.func @transform_2(%arg0: i32) -> (i32, i32) {
    %c0_i32 = arith.constant 0 : i32
    %c0_i32_0 = arith.constant 0 : i32
    %c0_i32_1 = arith.constant 0 : i32
    return %c0_i32, %c0_i32_0 : i32, i32
  }
  func.func @transform_3(%arg0: i32) -> (i32, i32) {
    %c0_i32 = arith.constant 0 : i32
    %c0_i32_0 = arith.constant 0 : i32
    %c0_i32_1 = arith.constant 0 : i32
    return %c0_i32, %c0_i32_0 : i32, i32
  }
  func.func @transform_4(%arg0: i32) -> i32 {
    %c0_i32 = arith.constant 0 : i32
    %c0_i32_0 = arith.constant 0 : i32
    return %c0_i32 : i32
  }
  func.func @transform_5(%arg0: i32) -> (i32, i32) {
    %c0_i32 = arith.constant 0 : i32
    %c0_i32_0 = arith.constant 0 : i32
    return %c0_i32, %arg0 : i32, i32
  }
}

</mosaic_0001>

<llo_original>
// kernel: tpu_custom_call.1
$region0: #{tpu_custom_call.1}
  #allocation0 [shape = 'u32[]', space=smem, size = 0x4, offset = 0x4, fixed_abs, tag = 'smem constant byte address 0x4 - core index']
  #allocation1 [shape = 'u32[72,128]{1,0:T(1,128)}', space=vmem, size = 0x9000, scoped, tag = 'internal scratch']
  #allocation2 [shape = 'f32[1]{0:T(128)S(6)}', space=smem, size = 0x200, scoped, tag = 'scoped memory for tpu_custom_call.1']
  %s0 = inlined_call_operand.vmem [shape: f32[32,128], index: 0, kind: input, shape index: {}]
  %s1 = inlined_call_operand.vmem [shape: f32[256,32], index: 1, kind: input, shape index: {}]
  %s2 = inlined_call_operand.vmem [shape: f32[256,1], index: 2, kind: input, shape index: {}]
  %s3 = inlined_call_operand.vmem [shape: f32[256,1], index: 3, kind: input, shape index: {}]
  %s4 = inlined_call_operand.<no memory space> [shape: f32[1], index: 4, kind: input, shape index: {}]
  %s5 = inlined_call_operand.hbm [shape: f32[1,128], index: 5, kind: output, shape index: {}]
  %s6 = sld [smem:[#allocation0]]
  $region30: #{tpu_custom_call.1} parent=0
    _
  %s8 = ssub.s32 1, %s6
  %s9 = scalar_select 0, %s8, %s6
  %10 = sst [smem:[#allocation2]] %s4
  $region1: #{tpu_custom_call.1} parent=0
    #allocation3 [shape = 'u8[512]{0}', space=vmem, size = 0x400, scoped, tag = 'output window, operand 0, single buffered']
    #allocation4 [shape = 's32[1]{0}', space=sflag, size = 0x4, scoped, tag = 'scoped memory for tpu_custom_call.1']
    %11 = vsyncpa [#allocation4], 0
    // Predicated region
    $region2: #{tpu_custom_call.1} parent=1 // pred_check
      _
    $region3: #{tpu_custom_call.1} parent=1 // pred_check_branch
      %13 = sbr.rel (0) target = $region5
    $region4: #{tpu_custom_call.1} parent=1 // pred_region
      _
    $region5: #{tpu_custom_call.1} parent=1 // pred_fallthru
      _
    // Predicated region
    $region6: #{tpu_custom_call.1} parent=1 // pred_check
      _
    $region7: #{tpu_custom_call.1} parent=1 // pred_check_branch
      %15 = sbr.rel (0) target = $region9
    $region8: #{tpu_custom_call.1} parent=1 // pred_region
      _
    $region9: #{tpu_custom_call.1} parent=1 // pred_fallthru
      _
    // Predicated region
    $region10: #{tpu_custom_call.1} parent=1 // pred_check
      _
    $region11: #{tpu_custom_call.1} parent=1 // pred_check_branch
      %17 = sbr.rel (0) target = $region13
    $region12: #{tpu_custom_call.1} parent=1 // pred_region
      _
    $region13: #{tpu_custom_call.1} parent=1 // pred_fallthru
      _
    // Predicated region
    $region14: #{tpu_custom_call.1} parent=1 // pred_check
      _
    $region15: #{tpu_custom_call.1} parent=1 // pred_check_branch
      %19 = sbr.rel (0) target = $region17
    $region16: #{tpu_custom_call.1} parent=1 // pred_region
      _
    $region17: #{tpu_custom_call.1} parent=1 // pred_fallthru
      _
    // Predicated region
    $region18: #{tpu_custom_call.1} parent=1 // pred_check
      _
    $region19: #{tpu_custom_call.1} parent=1 // pred_check_branch
      %21 = sbr.rel (0) target = $region21
    $region20: #{tpu_custom_call.1} parent=1 // pred_region
      _
    $region21: #{tpu_custom_call.1} parent=1 // pred_fallthru
      _
    %v22 = vld [vmem:[%s1] sm:$0xff]
    %v23 = vld [vmem:[%s1 + $0x8] sm:$0xff]
    %v24 = vld [vmem:[%s1 + $0x10] sm:$0xff]
    %v25 = vld [vmem:[%s1 + $0x18] sm:$0xff]
    %v26 = vld [vmem:[%s1 + $0x20] sm:$0xff]
    %v27 = vld [vmem:[%s1 + $0x28] sm:$0xff]
    %v28 = vld [vmem:[%s1 + $0x30] sm:$0xff]
    %v29 = vld [vmem:[%s1 + $0x38] sm:$0xff]
    %v30 = vld [vmem:[%s1 + $0x40] sm:$0xff]
    %v31 = vld [vmem:[%s1 + $0x48] sm:$0xff]
    %v32 = vld [vmem:[%s1 + $0x50] sm:$0xff]
    %v33 = vld [vmem:[%s1 + $0x58] sm:$0xff]
    %v34 = vld [vmem:[%s1 + $0x60] sm:$0xff]
    %v35 = vld [vmem:[%s1 + $0x68] sm:$0xff]
    %v36 = vld [vmem:[%s1 + $0x70] sm:$0xff]
    %v37 = vld [vmem:[%s1 + $0x78] sm:$0xff]
    %v38 = vld [vmem:[%s1 + $0x80] sm:$0xff]
    %v39 = vld [vmem:[%s1 + $0x88] sm:$0xff]
    %v40 = vld [vmem:[%s1 + $0x90] sm:$0xff]
    %v41 = vld [vmem:[%s1 + $0x98] sm:$0xff]
    %v42 = vld [vmem:[%s1 + $0xa0] sm:$0xff]
    %v43 = vld [vmem:[%s1 + $0xa8] sm:$0xff]
    %v44 = vld [vmem:[%s1 + $0xb0] sm:$0xff]
    %v45 = vld [vmem:[%s1 + $0xb8] sm:$0xff]
    %v46 = vld [vmem:[%s1 + $0xc0] sm:$0xff]
    %v47 = vld [vmem:[%s1 + $0xc8] sm:$0xff]
    %v48 = vld [vmem:[%s1 + $0xd0] sm:$0xff]
    %v49 = vld [vmem:[%s1 + $0xd8] sm:$0xff]
    %v50 = vld [vmem:[%s1 + $0xe0] sm:$0xff]
    %v51 = vld [vmem:[%s1 + $0xe8] sm:$0xff]
    %v52 = vld [vmem:[%s1 + $0xf0] sm:$0xff]
    %v53 = vld [vmem:[%s1 + $0xf8] sm:$0xff]
    %v54 = vld [vmem:[%s0] sm:$0xff]
    %v55 = vld [vmem:[%s0 + $0x8] sm:$0xff]
    %v56 = vld [vmem:[%s0 + $0x10] sm:$0xff]
    %v57 = vld [vmem:[%s0 + $0x18] sm:$0xff]
    %v58 = vld [vmem:[%s2] sm:$0xff]
    %v59 = vld [vmem:[%s2 + $0x8] sm:$0xff]
    %v60 = vld [vmem:[%s2 + $0x10] sm:$0xff]
    %v61 = vld [vmem:[%s2 + $0x18] sm:$0xff]
    %v62 = vld [vmem:[%s2 + $0x20] sm:$0xff]
    %v63 = vld [vmem:[%s2 + $0x28] sm:$0xff]
    %v64 = vld [vmem:[%s2 + $0x30] sm:$0xff]
    %v65 = vld [vmem:[%s2 + $0x38] sm:$0xff]
    %v66 = vld [vmem:[%s2 + $0x40] sm:$0xff]
    %v67 = vld [vmem:[%s2 + $0x48] sm:$0xff]
    %v68 = vld [vmem:[%s2 + $0x50] sm:$0xff]
    %v69 = vld [vmem:[%s2 + $0x58] sm:$0xff]
    %v70 = vld [vmem:[%s2 + $0x60] sm:$0xff]
    %v71 = vld [vmem:[%s2 + $0x68] sm:$0xff]
    %v72 = vld [vmem:[%s2 + $0x70] sm:$0xff]
    %v73 = vld [vmem:[%s2 + $0x78] sm:$0xff]
    %v74 = vld [vmem:[%s2 + $0x80] sm:$0xff]
    %v75 = vld [vmem:[%s2 + $0x88] sm:$0xff]
    %v76 = vld [vmem:[%s2 + $0x90] sm:$0xff]
    %v77 = vld [vmem:[%s2 + $0x98] sm:$0xff]
    %v78 = vld [vmem:[%s2 + $0xa0] sm:$0xff]
    %v79 = vld [vmem:[%s2 + $0xa8] sm:$0xff]
    %v80 = vld [vmem:[%s2 + $0xb0] sm:$0xff]
    %v81 = vld [vmem:[%s2 + $0xb8] sm:$0xff]
    %v82 = vld [vmem:[%s2 + $0xc0] sm:$0xff]
    %v83 = vld [vmem:[%s2 + $0xc8] sm:$0xff]
    %v84 = vld [vmem:[%s2 + $0xd0] sm:$0xff]
    %v85 = vld [vmem:[%s2 + $0xd8] sm:$0xff]
    %v86 = vld [vmem:[%s2 + $0xe0] sm:$0xff]
    %v87 = vld [vmem:[%s2 + $0xe8] sm:$0xff]
    %v88 = vld [vmem:[%s2 + $0xf0] sm:$0xff]
    %v89 = vld [vmem:[%s2 + $0xf8] sm:$0xff]
    %91 = vset.pattern.permute.xlu0 0
    %92 = vperm.xlu0 %91, %v58
    %v93 = vpop.permute.xlu0 %92
    %96 = vset.pattern.permute.xlu0 0
    %97 = vperm.xlu0 %96, %v59
    %v98 = vpop.permute.xlu0 %97
    %101 = vset.pattern.permute.xlu0 0
    %102 = vperm.xlu0 %101, %v60
    %v103 = vpop.permute.xlu0 %102
    %106 = vset.pattern.permute.xlu0 0
    %107 = vperm.xlu0 %106, %v61
    %v108 = vpop.permute.xlu0 %107
    %111 = vset.pattern.permute.xlu0 0
    %112 = vperm.xlu0 %111, %v62
    %v113 = vpop.permute.xlu0 %112
    %116 = vset.pattern.permute.xlu0 0
    %117 = vperm.xlu0 %116, %v63
    %v118 = vpop.permute.xlu0 %117
    %121 = vset.pattern.permute.xlu0 0
    %122 = vperm.xlu0 %121, %v64
    %v123 = vpop.permute.xlu0 %122
    %126 = vset.pattern.permute.xlu0 0
    %127 = vperm.xlu0 %126, %v65
    %v128 = vpop.permute.xlu0 %127
    %131 = vset.pattern.permute.xlu0 0
    %132 = vperm.xlu0 %131, %v66
    %v133 = vpop.permute.xlu0 %132
    %136 = vset.pattern.permute.xlu0 0
    %137 = vperm.xlu0 %136, %v67
    %v138 = vpop.permute.xlu0 %137
    %141 = vset.pattern.permute.xlu0 0
    %142 = vperm.xlu0 %141, %v68
    %v143 = vpop.permute.xlu0 %142
    %146 = vset.pattern.permute.xlu0 0
    %147 = vperm.xlu0 %146, %v69
    %v148 = vpop.permute.xlu0 %147
    %151 = vset.pattern.permute.xlu0 0
    %152 = vperm.xlu0 %151, %v70
    %v153 = vpop.permute.xlu0 %152
    %156 = vset.pattern.permute.xlu0 0
    %157 = vperm.xlu0 %156, %v71
    %v158 = vpop.permute.xlu0 %157
    %161 = vset.pattern.permute.xlu0 0
    %162 = vperm.xlu0 %161, %v72
    %v163 = vpop.permute.xlu0 %162
    %166 = vset.pattern.permute.xlu0 0
    %167 = vperm.xlu0 %166, %v73
    %v168 = vpop.permute.xlu0 %167
    %171 = vset.pattern.permute.xlu0 0
    %172 = vperm.xlu0 %171, %v74
    %v173 = vpop.permute.xlu0 %172
    %176 = vset.pattern.permute.xlu0 0
    %177 = vperm.xlu0 %176, %v75
    %v178 = vpop.permute.xlu0 %177
    %181 = vset.pattern.permute.xlu0 0
    %182 = vperm.xlu0 %181, %v76
    %v183 = vpop.permute.xlu0 %182
    %186 = vset.pattern.permute.xlu0 0
    %187 = vperm.xlu0 %186, %v77
    %v188 = vpop.permute.xlu0 %187
    %191 = vset.pattern.permute.xlu0 0
    %192 = vperm.xlu0 %191, %v78
    %v193 = vpop.permute.xlu0 %192
    %196 = vset.pattern.permute.xlu0 0
    %197 = vperm.xlu0 %196, %v79
    %v198 = vpop.permute.xlu0 %197
    %201 = vset.pattern.permute.xlu0 0
    %202 = vperm.xlu0 %201, %v80
    %v203 = vpop.permute.xlu0 %202
    %206 = vset.pattern.permute.xlu0 0
    %207 = vperm.xlu0 %206, %v81
    %v208 = vpop.permute.xlu0 %207
    %211 = vset.pattern.permute.xlu0 0
    %212 = vperm.xlu0 %211, %v82
    %v213 = vpop.permute.xlu0 %212
    %216 = vset.pattern.permute.xlu0 0
    %217 = vperm.xlu0 %216, %v83
    %v218 = vpop.permute.xlu0 %217
    %221 = vset.pattern.permute.xlu0 0
    %222 = vperm.xlu0 %221, %v84
    %v223 = vpop.permute.xlu0 %222
    %226 = vset.pattern.permute.xlu0 0
    %227 = vperm.xlu0 %226, %v85
    %v228 = vpop.permute.xlu0 %227
    %231 = vset.pattern.permute.xlu0 0
    %232 = vperm.xlu0 %231, %v86
    %v233 = vpop.permute.xlu0 %232
    %236 = vset.pattern.permute.xlu0 0
    %237 = vperm.xlu0 %236, %v87
    %v238 = vpop.permute.xlu0 %237
    %241 = vset.pattern.permute.xlu0 0
    %242 = vperm.xlu0 %241, %v88
    %v243 = vpop.permute.xlu0 %242
    %246 = vset.pattern.permute.xlu0 0
    %247 = vperm.xlu0 %246, %v89
    %v248 = vpop.permute.xlu0 %247
    %vm250 = vcmask 261120
    %v252 = vsel %vm250, %v22, 0
    %v255 = vsel %vm250, %v23, 0
    %v258 = vsel %vm250, %v24, 0
    %v261 = vsel %vm250, %v25, 0
    %v264 = vsel %vm250, %v26, 0
    %v267 = vsel %vm250, %v27, 0
    %v270 = vsel %vm250, %v28, 0
    %v273 = vsel %vm250, %v29, 0
    %v276 = vsel %vm250, %v30, 0
    %v279 = vsel %vm250, %v31, 0
    %v282 = vsel %vm250, %v32, 0
    %v285 = vsel %vm250, %v33, 0
    %v288 = vsel %vm250, %v34, 0
    %v291 = vsel %vm250, %v35, 0
    %v294 = vsel %vm250, %v36, 0
    %v297 = vsel %vm250, %v37, 0
    %v300 = vsel %vm250, %v38, 0
    %v303 = vsel %vm250, %v39, 0
    %v306 = vsel %vm250, %v40, 0
    %v309 = vsel %vm250, %v41, 0
    %v312 = vsel %vm250, %v42, 0
    %v315 = vsel %vm250, %v43, 0
    %v318 = vsel %vm250, %v44, 0
    %v321 = vsel %vm250, %v45, 0
    %v324 = vsel %vm250, %v46, 0
    %v327 = vsel %vm250, %v47, 0
    %v330 = vsel %vm250, %v48, 0
    %v333 = vsel %vm250, %v49, 0
    %v336 = vsel %vm250, %v50, 0
    %v339 = vsel %vm250, %v51, 0
    %v342 = vsel %vm250, %v52, 0
    %v345 = vsel %vm250, %v53, 0
    %347 = vmatpush.msra.mxu0 0.0
    %348 = vmatpush.msra.mxu0 0.0
    %349 = vmatpush.msra.mxu0 0.0
    %350 = vmatpush.msra.mxu0 0.0
    %351 = vmatpush.msra.mxu0 0.0
    %352 = vmatpush.msra.mxu0 0.0
    %353 = vmatpush.msra.mxu0 0.0
    %354 = vmatpush.msra.mxu0 0.0
    %355 = vmatpush.msra.mxu0 0.0
    %356 = vmatpush.msra.mxu0 0.0
    %357 = vmatpush.msra.mxu0 0.0
    %358 = vmatpush.msra.mxu0 0.0
    %359 = vmatpush.msra.mxu0 %v57
    %360 = vmatpush.msra.mxu0 %v56
    %361 = vmatpush.msra.mxu0 %v55
    %362 = vmatpush.msra.mxu0 %v54
    %363 = vmatmul.f32.gmra.mxu0 %v252
    %v364 = vpop.f32.mrf.mxu0
    %v365 = vadd.f32 %v93, %v364
    %366 = vmatmul.f32.gmra.mxu0 %v255
    %v367 = vpop.f32.mrf.mxu0
    %v368 = vadd.f32 %v98, %v367
    %369 = vmatmul.f32.gmra.mxu0 %v258
    %v370 = vpop.f32.mrf.mxu0
    %v371 = vadd.f32 %v103, %v370
    %372 = vmatmul.f32.gmra.mxu0 %v261
    %v373 = vpop.f32.mrf.mxu0
    %v374 = vadd.f32 %v108, %v373
    %375 = vmatmul.f32.gmra.mxu0 %v264
    %v376 = vpop.f32.mrf.mxu0
    %v377 = vadd.f32 %v113, %v376
    %378 = vmatmul.f32.gmra.mxu0 %v267
    %v379 = vpop.f32.mrf.mxu0
    %v380 = vadd.f32 %v118, %v379
    %381 = vmatmul.f32.gmra.mxu0 %v270
    %v382 = vpop.f32.mrf.mxu0
    %v383 = vadd.f32 %v123, %v382
    %384 = vmatmul.f32.gmra.mxu0 %v273
    %v385 = vpop.f32.mrf.mxu0
    %v386 = vadd.f32 %v128, %v385
    %387 = vmatmul.f32.gmra.mxu0 %v276
    %v388 = vpop.f32.mrf.mxu0
    %v389 = vadd.f32 %v133, %v388
    %390 = vmatmul.f32.gmra.mxu0 %v279
    %v391 = vpop.f32.mrf.mxu0
    %v392 = vadd.f32 %v138, %v391
    %393 = vmatmul.f32.gmra.mxu0 %v282
    %v394 = vpop.f32.mrf.mxu0
    %v395 = vadd.f32 %v143, %v394
    %396 = vmatmul.f32.gmra.mxu0 %v285
    %v397 = vpop.f32.mrf.mxu0
    %v398 = vadd.f32 %v148, %v397
    %399 = vmatmul.f32.gmra.mxu0 %v288
    %v400 = vpop.f32.mrf.mxu0
    %v401 = vadd.f32 %v153, %v400
    %402 = vmatmul.f32.gmra.mxu0 %v291
    %v403 = vpop.f32.mrf.mxu0
    %v404 = vadd.f32 %v158, %v403
    %405 = vmatmul.f32.gmra.mxu0 %v294
    %v406 = vpop.f32.mrf.mxu0
    %v407 = vadd.f32 %v163, %v406
    %408 = vmatmul.f32.gmra.mxu0 %v297
    %v409 = vpop.f32.mrf.mxu0
    %v410 = vadd.f32 %v168, %v409
    %411 = vmatmul.f32.gmra.mxu0 %v300
    %v412 = vpop.f32.mrf.mxu0
    %v413 = vadd.f32 %v173, %v412
    %414 = vmatmul.f32.gmra.mxu0 %v303
    %v415 = vpop.f32.mrf.mxu0
    %v416 = vadd.f32 %v178, %v415
    %417 = vmatmul.f32.gmra.mxu0 %v306
    %v418 = vpop.f32.mrf.mxu0
    %v419 = vadd.f32 %v183, %v418
    %420 = vmatmul.f32.gmra.mxu0 %v309
    %v421 = vpop.f32.mrf.mxu0
    %v422 = vadd.f32 %v188, %v421
    %423 = vmatmul.f32.gmra.mxu0 %v312
    %v424 = vpop.f32.mrf.mxu0
    %v425 = vadd.f32 %v193, %v424
    %426 = vmatmul.f32.gmra.mxu0 %v315
    %v427 = vpop.f32.mrf.mxu0
    %v428 = vadd.f32 %v198, %v427
    %429 = vmatmul.f32.gmra.mxu0 %v318
    %v430 = vpop.f32.mrf.mxu0
    %v431 = vadd.f32 %v203, %v430
    %432 = vmatmul.f32.gmra.mxu0 %v321
    %v433 = vpop.f32.mrf.mxu0
    %v434 = vadd.f32 %v208, %v433
    %435 = vmatmul.f32.gmra.mxu0 %v324
    %v436 = vpop.f32.mrf.mxu0
    %v437 = vadd.f32 %v213, %v436
    %438 = vmatmul.f32.gmra.mxu0 %v327
    %v439 = vpop.f32.mrf.mxu0
    %v440 = vadd.f32 %v218, %v439
    %441 = vmatmul.f32.gmra.mxu0 %v330
    %v442 = vpop.f32.mrf.mxu0
    %v443 = vadd.f32 %v223, %v442
    %444 = vmatmul.f32.gmra.mxu0 %v333
    %v445 = vpop.f32.mrf.mxu0
    %v446 = vadd.f32 %v228, %v445
    %447 = vmatmul.f32.gmra.mxu0 %v336
    %v448 = vpop.f32.mrf.mxu0
    %v449 = vadd.f32 %v233, %v448
    %450 = vmatmul.f32.gmra.mxu0 %v339
    %v451 = vpop.f32.mrf.mxu0
    %v452 = vadd.f32 %v238, %v451
    %453 = vmatmul.f32.gmra.mxu0 %v342
    %v454 = vpop.f32.mrf.mxu0
    %v455 = vadd.f32 %v243, %v454
    %456 = vmatmul.f32.gmra.mxu0 %v345
    %v457 = vpop.f32.mrf.mxu0
    %v458 = vadd.f32 %v248, %v457
    %459 = vdwg.mxu0
    %v460 = vmax.f32 %v365, 0.0
    %v461 = vmax.f32 %v368, 0.0
    %v462 = vmax.f32 %v371, 0.0
    %v463 = vmax.f32 %v374, 0.0
    %v464 = vmax.f32 %v377, 0.0
    %v465 = vmax.f32 %v380, 0.0
    %v466 = vmax.f32 %v383, 0.0
    %v467 = vmax.f32 %v386, 0.0
    %v468 = vmax.f32 %v389, 0.0
    %v469 = vmax.f32 %v392, 0.0
    %v470 = vmax.f32 %v395, 0.0
    %v471 = vmax.f32 %v398, 0.0
    %v472 = vmax.f32 %v401, 0.0
    %v473 = vmax.f32 %v404, 0.0
    %v474 = vmax.f32 %v407, 0.0
    %v475 = vmax.f32 %v410, 0.0
    %v476 = vmax.f32 %v413, 0.0
    %v477 = vmax.f32 %v416, 0.0
    %v478 = vmax.f32 %v419, 0.0
    %v479 = vmax.f32 %v422, 0.0
    %v480 = vmax.f32 %v425, 0.0
    %v481 = vmax.f32 %v428, 0.0
    %v482 = vmax.f32 %v431, 0.0
    %v483 = vmax.f32 %v434, 0.0
    %v484 = vmax.f32 %v437, 0.0
    %v485 = vmax.f32 %v440, 0.0
    %v486 = vmax.f32 %v443, 0.0
    %v487 = vmax.f32 %v446, 0.0
    %v488 = vmax.f32 %v449, 0.0
    %v489 = vmax.f32 %v452, 0.0
    %v490 = vmax.f32 %v455, 0.0
    %v491 = vmax.f32 %v458, 0.0
    %v492 = vld [vmem:[%s3] sm:$0xff]
    %v493 = vld [vmem:[%s3 + $0x8] sm:$0xff]
    %v494 = vld [vmem:[%s3 + $0x10] sm:$0xff]
    %v495 = vld [vmem:[%s3 + $0x18] sm:$0xff]
    %v496 = vld [vmem:[%s3 + $0x20] sm:$0xff]
    %v497 = vld [vmem:[%s3 + $0x28] sm:$0xff]
    %v498 = vld [vmem:[%s3 + $0x30] sm:$0xff]
    %v499 = vld [vmem:[%s3 + $0x38] sm:$0xff]
    %v500 = vld [vmem:[%s3 + $0x40] sm:$0xff]
    %v501 = vld [vmem:[%s3 + $0x48] sm:$0xff]
    %v502 = vld [vmem:[%s3 + $0x50] sm:$0xff]
    %v503 = vld [vmem:[%s3 + $0x58] sm:$0xff]
    %v504 = vld [vmem:[%s3 + $0x60] sm:$0xff]
    %v505 = vld [vmem:[%s3 + $0x68] sm:$0xff]
    %v506 = vld [vmem:[%s3 + $0x70] sm:$0xff]
    %v507 = vld [vmem:[%s3 + $0x78] sm:$0xff]
    %v508 = vld [vmem:[%s3 + $0x80] sm:$0xff]
    %v509 = vld [vmem:[%s3 + $0x88] sm:$0xff]
    %v510 = vld [vmem:[%s3 + $0x90] sm:$0xff]
    %v511 = vld [vmem:[%s3 + $0x98] sm:$0xff]
    %v512 = vld [vmem:[%s3 + $0xa0] sm:$0xff]
    %v513 = vld [vmem:[%s3 + $0xa8] sm:$0xff]
    %v514 = vld [vmem:[%s3 + $0xb0] sm:$0xff]
    %v515 = vld [vmem:[%s3 + $0xb8] sm:$0xff]
    %v516 = vld [vmem:[%s3 + $0xc0] sm:$0xff]
    %v517 = vld [vmem:[%s3 + $0xc8] sm:$0xff]
    %v518 = vld [vmem:[%s3 + $0xd0] sm:$0xff]
    %v519 = vld [vmem:[%s3 + $0xd8] sm:$0xff]
    %v520 = vld [vmem:[%s3 + $0xe0] sm:$0xff]
    %v521 = vld [vmem:[%s3 + $0xe8] sm:$0xff]
    %v522 = vld [vmem:[%s3 + $0xf0] sm:$0xff]
    %v523 = vld [vmem:[%s3 + $0xf8] sm:$0xff]
    %525 = vset.pattern.permute.xlu0 0
    %526 = vperm.xlu0 %525, %v492
    %v527 = vpop.permute.xlu0 %526
    %530 = vset.pattern.permute.xlu0 0
    %531 = vperm.xlu0 %530, %v493
    %v532 = vpop.permute.xlu0 %531
    %535 = vset.pattern.permute.xlu0 0
    %536 = vperm.xlu0 %535, %v494
    %v537 = vpop.permute.xlu0 %536
    %540 = vset.pattern.permute.xlu0 0
    %541 = vperm.xlu0 %540, %v495
    %v542 = vpop.permute.xlu0 %541
    %545 = vset.pattern.permute.xlu0 0
    %546 = vperm.xlu0 %545, %v496
    %v547 = vpop.permute.xlu0 %546
    %550 = vset.pattern.permute.xlu0 0
    %551 = vperm.xlu0 %550, %v497
    %v552 = vpop.permute.xlu0 %551
    %555 = vset.pattern.permute.xlu0 0
    %556 = vperm.xlu0 %555, %v498
    %v557 = vpop.permute.xlu0 %556
    %560 = vset.pattern.permute.xlu0 0
    %561 = vperm.xlu0 %560, %v499
    %v562 = vpop.permute.xlu0 %561
    %565 = vset.pattern.permute.xlu0 0
    %566 = vperm.xlu0 %565, %v500
    %v567 = vpop.permute.xlu0 %566
    %570 = vset.pattern.permute.xlu0 0
    %571 = vperm.xlu0 %570, %v501
    %v572 = vpop.permute.xlu0 %571
    %575 = vset.pattern.permute.xlu0 0
    %576 = vperm.xlu0 %575, %v502
    %v577 = vpop.permute.xlu0 %576
    %580 = vset.pattern.permute.xlu0 0
    %581 = vperm.xlu0 %580, %v503
    %v582 = vpop.permute.xlu0 %581
    %585 = vset.pattern.permute.xlu0 0
    %586 = vperm.xlu0 %585, %v504
    %v587 = vpop.permute.xlu0 %586
    %590 = vset.pattern.permute.xlu0 0
    %591 = vperm.xlu0 %590, %v505
    %v592 = vpop.permute.xlu0 %591
    %595 = vset.pattern.permute.xlu0 0
    %596 = vperm.xlu0 %595, %v506
    %v597 = vpop.permute.xlu0 %596
    %600 = vset.pattern.permute.xlu0 0
    %601 = vperm.xlu0 %600, %v507
    %v602 = vpop.permute.xlu0 %601
    %605 = vset.pattern.permute.xlu0 0
    %606 = vperm.xlu0 %605, %v508
    %v607 = vpop.permute.xlu0 %606
    %610 = vset.pattern.permute.xlu0 0
    %611 = vperm.xlu0 %610, %v509
    %v612 = vpop.permute.xlu0 %611
    %615 = vset.pattern.permute.xlu0 0
    %616 = vperm.xlu0 %615, %v510
    %v617 = vpop.permute.xlu0 %616
    %620 = vset.pattern.permute.xlu0 0
    %621 = vperm.xlu0 %620, %v511
    %v622 = vpop.permute.xlu0 %621
    %625 = vset.pattern.permute.xlu0 0
    %626 = vperm.xlu0 %625, %v512
    %v627 = vpop.permute.xlu0 %626
    %630 = vset.pattern.permute.xlu0 0
    %631 = vperm.xlu0 %630, %v513
    %v632 = vpop.permute.xlu0 %631
    %635 = vset.pattern.permute.xlu0 0
    %636 = vperm.xlu0 %635, %v514
    %v637 = vpop.permute.xlu0 %636
    %640 = vset.pattern.permute.xlu0 0
    %641 = vperm.xlu0 %640, %v515
    %v642 = vpop.permute.xlu0 %641
    %645 = vset.pattern.permute.xlu0 0
    %646 = vperm.xlu0 %645, %v516
    %v647 = vpop.permute.xlu0 %646
    %650 = vset.pattern.permute.xlu0 0
    %651 = vperm.xlu0 %650, %v517
    %v652 = vpop.permute.xlu0 %651
    %655 = vset.pattern.permute.xlu0 0
    %656 = vperm.xlu0 %655, %v518
    %v657 = vpop.permute.xlu0 %656
    %660 = vset.pattern.permute.xlu0 0
    %661 = vperm.xlu0 %660, %v519
    %v662 = vpop.permute.xlu0 %661
    %665 = vset.pattern.permute.xlu0 0
    %666 = vperm.xlu0 %665, %v520
    %v667 = vpop.permute.xlu0 %666
    %670 = vset.pattern.permute.xlu0 0
    %671 = vperm.xlu0 %670, %v521
    %v672 = vpop.permute.xlu0 %671
    %675 = vset.pattern.permute.xlu0 0
    %676 = vperm.xlu0 %675, %v522
    %v677 = vpop.permute.xlu0 %676
    %680 = vset.pattern.permute.xlu0 0
    %681 = vperm.xlu0 %680, %v523
    %v682 = vpop.permute.xlu0 %681
    %v684 = vmul.f32 %v460, %v527
    %v685 = vmul.f32 %v461, %v532
    %v686 = vmul.f32 %v462, %v537
    %v687 = vmul.f32 %v463, %v542
    %v688 = vmul.f32 %v464, %v547
    %v689 = vmul.f32 %v465, %v552
    %v690 = vmul.f32 %v466, %v557
    %v691 = vmul.f32 %v467, %v562
    %v692 = vmul.f32 %v468, %v567
    %v693 = vmul.f32 %v469, %v572
    %v694 = vmul.f32 %v470, %v577
    %v695 = vmul.f32 %v471, %v582
    %v696 = vmul.f32 %v472, %v587
    %v697 = vmul.f32 %v473, %v592
    %v698 = vmul.f32 %v474, %v597
    %v699 = vmul.f32 %v475, %v602
    %v700 = vmul.f32 %v476, %v607
    %v701 = vmul.f32 %v477, %v612
    %v702 = vmul.f32 %v478, %v617
    %v703 = vmul.f32 %v479, %v622
    %v704 = vmul.f32 %v480, %v627
    %v705 = vmul.f32 %v481, %v632
    %v706 = vmul.f32 %v482, %v637
    %v707 = vmul.f32 %v483, %v642
    %v708 = vmul.f32 %v484, %v647
    %v709 = vmul.f32 %v485, %v652
    %v710 = vmul.f32 %v486, %v657
    %v711 = vmul.f32 %v487, %v662
    %v712 = vmul.f32 %v488, %v667
    %v713 = vmul.f32 %v489, %v672
    %v714 = vmul.f32 %v490, %v677
    %v715 = vmul.f32 %v491, %v682
    %v716 = vadd.f32 %v684, %v685
    %v717 = vadd.f32 %v716, %v686
    %v718 = vadd.f32 %v717, %v687
    %v719 = vadd.f32 %v718, %v688
    %v720 = vadd.f32 %v719, %v689
    %v721 = vadd.f32 %v720, %v690
    %v722 = vadd.f32 %v721, %v691
    %v723 = vadd.f32 %v722, %v692
    %v724 = vadd.f32 %v723, %v693
    %v725 = vadd.f32 %v724, %v694
    %v726 = vadd.f32 %v725, %v695
    %v727 = vadd.f32 %v726, %v696
    %v728 = vadd.f32 %v727, %v697
    %v729 = vadd.f32 %v728, %v698
    %v730 = vadd.f32 %v729, %v699
    %v731 = vadd.f32 %v730, %v700
    %v732 = vadd.f32 %v731, %v701
    %v733 = vadd.f32 %v732, %v702
    %v734 = vadd.f32 %v733, %v703
    %v735 = vadd.f32 %v734, %v704
    %v736 = vadd.f32 %v735, %v705
    %v737 = vadd.f32 %v736, %v706
    %v738 = vadd.f32 %v737, %v707
    %v739 = vadd.f32 %v738, %v708
    %v740 = vadd.f32 %v739, %v709
    %v741 = vadd.f32 %v740, %v710
    %v742 = vadd.f32 %v741, %v711
    %v743 = vadd.f32 %v742, %v712
    %v744 = vadd.f32 %v743, %v713
    %v745 = vadd.f32 %v744, %v714
    %v746 = vadd.f32 %v745, %v715
    %v747 = vrot.slane %v746, 4
    %v748 = vadd.f32 %v746, %v747
    %v749 = vrot.slane %v748, 2
    %v750 = vadd.f32 %v748, %v749
    %v751 = vrot.slane %v750, 1
    %v752 = vadd.f32 %v750, %v751
    %s753 = sld [smem:[#allocation2]]
    %v754 = vstv %s753
    %v755 = vadd.f32 %v752, %v754
    %v756 = vsub.f32 0.0, %v755
    %v757 = vmul.f32 %v756, 1.442695
    %v758 = vpow.pop %v757
    %v759 = vadd.f32 %v758, 1.0
    %v760 = vrcp.pop %v759
    %761 = vst [vmem:[#allocation3] sm:$0x1] %v760
    // Predicated region
    $region22: #{tpu_custom_call.1} parent=1 // pred_check
      _
    $region23: #{tpu_custom_call.1} parent=1 // pred_check_branch
      %763 = sbr.rel (0) target = $region25
    $region24: #{tpu_custom_call.1} parent=1 // pred_region
      %765 = vsyncadd [#allocation4], 0
      %s767 = sshll.u32 [#allocation3], 4
      %s768 = int_to_ptr.vmem [resolvable:$true] %s767
      %s769 = sshll.u32 %s5, 4
      %s770 = int_to_ptr.hbm [resolvable:$true] %s769
      %772 = dma.vmem_to_hbm [thread:$0]  %s768, 16, %s770, [#allocation4]
    $region25: #{tpu_custom_call.1} parent=1 // pred_fallthru
      _
    // Predicated region
    $region26: #{tpu_custom_call.1} parent=1 // pred_check
      _
    $region27: #{tpu_custom_call.1} parent=1 // pred_check_branch
      %774 = sbr.rel (0) target = $region29
    $region28: #{tpu_custom_call.1} parent=1 // pred_region
      %776 = dma.done [#allocation4], 16
    $region29: #{tpu_custom_call.1} parent=1 // pred_fallthru
      _
    %777 = vsyncpa [#allocation4], 1

</llo_original>
